<compile_context>
chip_gen: v6e
topology: v6e:2x2x1
jax: 0.10.0
libtpu: 0.0.40
codegen_flags: <defaults>
</compile_context>

<pallas_src>
import jax
import jax.numpy as jnp
import numpy as np
from jax.experimental import pallas as pl
from jax.experimental.pallas import tpu as pltpu


def actor_kernel(x_ref, inv_e_ref,
                 w1_ref, b1_ref, w2_ref, b2_ref, w3_ref, b3_ref, w4_ref, b4_ref,
                 act_ref, logp_ref):
    cdt = w1_ref.dtype                      # MXU-input dtype (bf16 by default)
    x = x_ref[...].astype(cdt)

    # 3-layer ReLU MLP: bf16 MXU matmuls, f32 accumulation / bias / ReLU.
    h = jnp.dot(x, w1_ref[...], preferred_element_type=jnp.float32) + b1_ref[...]
    h = jnp.maximum(h, 0.0).astype(cdt)
    h = jnp.dot(h, w2_ref[...], preferred_element_type=jnp.float32) + b2_ref[...]
    h = jnp.maximum(h, 0.0).astype(cdt)
    h = jnp.dot(h, w3_ref[...], preferred_element_type=jnp.float32) + b3_ref[...]
    h = jnp.maximum(h, 0.0).astype(cdt)

    # Action head in lane-dense (A, TB) layout: contract h's 64-dim with
    # w4 (A, 64) so every downstream op is 8-sublane x TB-lane dense.
    logits = jax.lax.dot_general(
        w4_ref[...], h, (((1,), (1,)), ((), ())),
        preferred_element_type=jnp.float32) + b4_ref[...]            # (A, TB)
    A, TB = logits.shape

    # Log-softmax pieces (f32).
    m = jnp.max(logits, axis=0, keepdims=True)                       # (1, TB)
    p = jnp.exp(logits - m)                                          # (A, TB)
    lse = jnp.log(jnp.sum(p, axis=0, keepdims=True))                 # (1, TB)

    # Categorical sampling via the exponential race:
    #   argmax_i p_i / E_i  ==  argmax_i (logits_i + Gumbel_i),  E_i ~ Exp(1).
    pert = p * inv_e_ref[...]                                        # (A, TB)
    pmax = jnp.max(pert, axis=0, keepdims=True)
    row = jax.lax.broadcasted_iota(jnp.int32, (A, TB), 0)
    idx = jnp.min(jnp.where(pert == pmax, row, A), axis=0, keepdims=True)  # first argmax

    # Selected log-prob only: sel_logit - m - lse.
    sel_logit = jnp.sum(jnp.where(row == idx, logits, 0.0), axis=0, keepdims=True)

    act_ref[...] = idx.astype(jnp.int32)                             # (1, TB) dense store
    logp_ref[...] = sel_logit - m - lse                              # (1, TB) dense store


def _round_up(x, m):
    return ((x + m - 1) // m) * m


def actor_forward(obs, params, seed, *, block_b=2048, io_dtype=jnp.bfloat16):
    """obs: (B, input_dim) float; returns (actions (B,1) int32, log_probs (B,1) f32)."""
    B, input_dim = obs.shape
    A = params["w4"].shape[0]

    # Batch tile selection:
    #   * multi-tile case -> tile is a multiple of 128 lanes (dense output stores),
    #   * medium batches  -> split into >= 2 tiles so v7x megacore can shard,
    #   * tiny batches    -> single tile equal to the 8-rounded batch.
    block_b = max(128, _round_up(block_b, 128))
    if B > block_b:
        tb = block_b
    elif B >= 256:
        tb = min(block_b, _round_up((B + 1) // 2, 128))
    else:
        tb = max(8, _round_up(B, 8))
    grid = (B + tb - 1) // tb
    b_pad = grid * tb

    x = obs.astype(io_dtype)
    if b_pad != B:
        x = jnp.pad(x, ((0, b_pad - B), (0, 0)))

    # Noise precomputed outside the kernel (TPU stateful PRNG has no
    # interpret/CPU lowering): inverse exponential draws for the race.
    key = jax.random.PRNGKey(seed)
    u = jax.random.uniform(key, (A, b_pad), dtype=jnp.float32,
                           minval=1e-12, maxval=1.0)
    inv_e = 1.0 / (-jnp.log(u))

    obs_spec = pl.BlockSpec((tb, input_dim), lambda i: (i, 0))
    noise_spec = pl.BlockSpec((A, tb), lambda i: (0, i))
    out_spec = pl.BlockSpec((1, tb), lambda i: (0, i))
    resident = lambda i: (0, 0)                       # weights stay in VMEM
    weight_names = ("w1", "b1", "w2", "b2", "w3", "b3", "w4", "b4")
    w_specs = [pl.BlockSpec(tuple(params[n].shape), resident) for n in weight_names]

    # Advisory cost estimate for XLA's scheduler.
    flops = 2 * b_pad * (input_dim * 64 + 64 * 128 + 128 * 64 + 64 * A)
    transcendentals = b_pad * (A + 1)
    w_bytes = sum(int(np.prod(params[n].shape)) * params[n].dtype.itemsize
                  for n in weight_names)
    bytes_accessed = (b_pad * input_dim * jnp.dtype(io_dtype).itemsize  # obs stream
                      + A * b_pad * 4                                   # noise stream
                      + w_bytes                                         # resident weights
                      + b_pad * (4 + 4))                                # two (1,B) outputs

    actions, logp = pl.pallas_call(
        actor_kernel,
        out_shape=(jax.ShapeDtypeStruct((1, b_pad), jnp.int32),
                   jax.ShapeDtypeStruct((1, b_pad), jnp.float32)),
        grid=(grid,),
        in_specs=[obs_spec, noise_spec] + w_specs,
        out_specs=[out_spec, out_spec],
        compiler_params=pltpu.CompilerParams(
            dimension_semantics=("parallel",),
            vmem_limit_bytes=32 * 1024 * 1024),
        cost_estimate=pl.CostEstimate(flops=flops,
                                      transcendentals=transcendentals,
                                      bytes_accessed=bytes_accessed),
    )(x, inv_e,
      params["w1"], params["b1"], params["w2"], params["b2"],
      params["w3"], params["b3"], params["w4"], params["b4"])

    # TODO(synk): torch returns int64 actions; int32 kept here (TPU-native).
    actions = actions[0, :B].reshape(B, 1)
    logp = logp[0, :B].reshape(B, 1)
    return actions, logp


def orthogonal_init(key, out_dim, in_dim, gain):
    """Deterministic orthogonal init (same spirit as torch.nn.init.orthogonal_)."""
    a = jax.random.normal(key, (max(out_dim, in_dim), min(out_dim, in_dim)),
                          dtype=jnp.float32)
    q, r = jnp.linalg.qr(a)
    q = q * jnp.sign(jnp.diagonal(r))
    if out_dim < in_dim:
        q = q.T
    return (gain * q[:out_dim, :in_dim]).astype(jnp.float32)


def make_actor_params(key, input_dim, action_dim, param_dtype=jnp.bfloat16):
    k1, k2, k3, k4 = jax.random.split(key, 4)
    g = float(np.sqrt(2.0))
    # Hidden layers stored (in, out) for x @ W; head stored in torch (out, in)
    # layout so the kernel can emit lane-dense (A, TB) logits directly.
    w1 = orthogonal_init(k1, 64, input_dim, g).T.astype(param_dtype)     # (in, 64)
    w2 = orthogonal_init(k2, 128, 64, g).T.astype(param_dtype)           # (64, 128)
    w3 = orthogonal_init(k3, 64, 128, g).T.astype(param_dtype)           # (128, 64)
    w4 = orthogonal_init(k4, action_dim, 64, 0.01).astype(param_dtype)   # (A, 64), gain=0.01
    return {
        "w1": w1, "b1": jnp.zeros((1, 64), jnp.float32),
        "w2": w2, "b2": jnp.zeros((1, 128), jnp.float32),
        "w3": w3, "b3": jnp.zeros((1, 64), jnp.float32),
        "w4": w4, "b4": jnp.zeros((action_dim, 1), jnp.float32),
    }


if __name__ == "__main__":
    input_dim = 32
    action_dim = 8
    batch = 8

    root = jax.random.PRNGKey(0)
    k_params, k_obs = jax.random.split(root, 2)

    params = make_actor_params(k_params, input_dim, action_dim)
    obs = jax.random.normal(k_obs, (batch, input_dim), dtype=jnp.float32)

    actions, action_log_probs = actor_forward(obs, params, seed=1234)
    jax.block_until_ready((actions, action_log_probs))

    assert actions.shape == (batch, 1) and actions.dtype == jnp.int32
    assert action_log_probs.shape == (batch, 1)
    assert action_log_probs.dtype == jnp.float32
    assert bool(jnp.all(actions >= 0)) and bool(jnp.all(actions < action_dim))
    assert bool(jnp.all(action_log_probs <= 0.0))

    print("KERNEL_OK")
</pallas_src>

<mosaic_0001>
module attributes {stable_mosaic.version = 11 : i64} {
  func.func @actor_kernel(%arg0: i32, %arg1: memref<8x32xbf16, #tpu.memory_space<vmem>>, %arg2: memref<8x8xf32, #tpu.memory_space<vmem>>, %arg3: memref<32x64xbf16, #tpu.memory_space<vmem>>, %arg4: memref<1x64xf32, #tpu.memory_space<vmem>>, %arg5: memref<64x128xbf16, #tpu.memory_space<vmem>>, %arg6: memref<1x128xf32, #tpu.memory_space<vmem>>, %arg7: memref<128x64xbf16, #tpu.memory_space<vmem>>, %arg8: memref<1x64xf32, #tpu.memory_space<vmem>>, %arg9: memref<8x64xbf16, #tpu.memory_space<vmem>>, %arg10: memref<8x1xf32, #tpu.memory_space<vmem>>, %arg11: memref<1x8xi32, #tpu.memory_space<vmem>>, %arg12: memref<1x8xf32, #tpu.memory_space<vmem>>) attributes {dimension_semantics = [#tpu.dimension_semantics<parallel>], iteration_bounds = array<i64: 1>, scalar_prefetch = 0 : i64, scratch_operands = 0 : i64, tpu.core_type = #tpu.core_type<tc>, window_params = [{transform_indices = @transform_0, window_bounds = array<i64: 8, 32>}, {transform_indices = @transform_1, window_bounds = array<i64: 8, 8>}, {pipeline_mode = #tpu.pipeline_mode<synchronous>, transform_indices = @transform_2, window_bounds = array<i64: 32, 64>}, {pipeline_mode = #tpu.pipeline_mode<synchronous>, transform_indices = @transform_3, window_bounds = array<i64: 1, 64>}, {pipeline_mode = #tpu.pipeline_mode<synchronous>, transform_indices = @transform_4, window_bounds = array<i64: 64, 128>}, {pipeline_mode = #tpu.pipeline_mode<synchronous>, transform_indices = @transform_5, window_bounds = array<i64: 1, 128>}, {pipeline_mode = #tpu.pipeline_mode<synchronous>, transform_indices = @transform_6, window_bounds = array<i64: 128, 64>}, {pipeline_mode = #tpu.pipeline_mode<synchronous>, transform_indices = @transform_7, window_bounds = array<i64: 1, 64>}, {pipeline_mode = #tpu.pipeline_mode<synchronous>, transform_indices = @transform_8, window_bounds = array<i64: 8, 64>}, {pipeline_mode = #tpu.pipeline_mode<synchronous>, transform_indices = @transform_9, window_bounds = array<i64: 8, 1>}, {transform_indices = @transform_10, window_bounds = array<i64: 1, 8>}, {transform_indices = @transform_11, window_bounds = array<i64: 1, 8>}]} {
    %c0 = arith.constant 0 : index
    %c0_0 = arith.constant 0 : index
    %0 = vector.load %arg1[%c0, %c0_0] : memref<8x32xbf16, #tpu.memory_space<vmem>>, vector<8x32xbf16>
    %c0_1 = arith.constant 0 : index
    %c0_2 = arith.constant 0 : index
    %1 = vector.load %arg3[%c0_1, %c0_2] : memref<32x64xbf16, #tpu.memory_space<vmem>>, vector<32x64xbf16>
    %cst = arith.constant dense<0.000000e+00> : vector<8x64xf32>
    %2 = tpu.matmul %0, %1, %cst {dimension_numbers = #tpu.dot_dimension_numbers<[1], [0], [0], [1], [0, 0, 1, 1], [], []>} : vector<8x32xbf16>, vector<32x64xbf16>, vector<8x64xf32> -> vector<8x64xf32>
    %c0_3 = arith.constant 0 : index
    %c0_4 = arith.constant 0 : index
    %3 = vector.load %arg4[%c0_3, %c0_4] : memref<1x64xf32, #tpu.memory_space<vmem>>, vector<1x64xf32>
    %4 = vector.broadcast %3 : vector<1x64xf32> to vector<8x64xf32>
    %5 = arith.addf %2, %4 : vector<8x64xf32>
    %cst_5 = arith.constant 0.000000e+00 : f32
    %6 = vector.broadcast %cst_5 : f32 to vector<8x64xf32>
    %7 = arith.maximumf %5, %6 : vector<8x64xf32>
    %8 = arith.truncf %7 : vector<8x64xf32> to vector<8x64xbf16>
    %c0_6 = arith.constant 0 : index
    %c0_7 = arith.constant 0 : index
    %9 = vector.load %arg5[%c0_6, %c0_7] : memref<64x128xbf16, #tpu.memory_space<vmem>>, vector<64x128xbf16>
    %cst_8 = arith.constant dense<0.000000e+00> : vector<8x128xf32>
    %10 = tpu.matmul %8, %9, %cst_8 {dimension_numbers = #tpu.dot_dimension_numbers<[1], [0], [0], [1], [0, 0, 1, 1], [], []>} : vector<8x64xbf16>, vector<64x128xbf16>, vector<8x128xf32> -> vector<8x128xf32>
    %c0_9 = arith.constant 0 : index
    %c0_10 = arith.constant 0 : index
    %11 = vector.load %arg6[%c0_9, %c0_10] : memref<1x128xf32, #tpu.memory_space<vmem>>, vector<1x128xf32>
    %12 = vector.broadcast %11 : vector<1x128xf32> to vector<8x128xf32>
    %13 = arith.addf %10, %12 : vector<8x128xf32>
    %cst_11 = arith.constant 0.000000e+00 : f32
    %14 = vector.broadcast %cst_11 : f32 to vector<8x128xf32>
    %15 = arith.maximumf %13, %14 : vector<8x128xf32>
    %16 = arith.truncf %15 : vector<8x128xf32> to vector<8x128xbf16>
    %c0_12 = arith.constant 0 : index
    %c0_13 = arith.constant 0 : index
    %17 = vector.load %arg7[%c0_12, %c0_13] : memref<128x64xbf16, #tpu.memory_space<vmem>>, vector<128x64xbf16>
    %cst_14 = arith.constant dense<0.000000e+00> : vector<8x64xf32>
    %18 = tpu.matmul %16, %17, %cst_14 {dimension_numbers = #tpu.dot_dimension_numbers<[1], [0], [0], [1], [0, 0, 1, 1], [], []>} : vector<8x128xbf16>, vector<128x64xbf16>, vector<8x64xf32> -> vector<8x64xf32>
    %c0_15 = arith.constant 0 : index
    %c0_16 = arith.constant 0 : index
    %19 = vector.load %arg8[%c0_15, %c0_16] : memref<1x64xf32, #tpu.memory_space<vmem>>, vector<1x64xf32>
    %20 = vector.broadcast %19 : vector<1x64xf32> to vector<8x64xf32>
    %21 = arith.addf %18, %20 : vector<8x64xf32>
    %cst_17 = arith.constant 0.000000e+00 : f32
    %22 = vector.broadcast %cst_17 : f32 to vector<8x64xf32>
    %23 = arith.maximumf %21, %22 : vector<8x64xf32>
    %24 = arith.truncf %23 : vector<8x64xf32> to vector<8x64xbf16>
    %c0_18 = arith.constant 0 : index
    %c0_19 = arith.constant 0 : index
    %25 = vector.load %arg9[%c0_18, %c0_19] : memref<8x64xbf16, #tpu.memory_space<vmem>>, vector<8x64xbf16>
    %cst_20 = arith.constant dense<0.000000e+00> : vector<8x8xf32>
    %26 = tpu.matmul %25, %24, %cst_20 {dimension_numbers = #tpu.dot_dimension_numbers<[1], [1], [0], [0], [0, 0, 1, 0], [], []>} : vector<8x64xbf16>, vector<8x64xbf16>, vector<8x8xf32> -> vector<8x8xf32>
    %c0_21 = arith.constant 0 : index
    %c0_22 = arith.constant 0 : index
    %27 = vector.load %arg10[%c0_21, %c0_22] : memref<8x1xf32, #tpu.memory_space<vmem>>, vector<8x1xf32>
    %28 = vector.broadcast %27 : vector<8x1xf32> to vector<8x8xf32>
    %29 = arith.addf %26, %28 : vector<8x8xf32>
    %cst_23 = arith.constant dense<0xFF800000> : vector<8xf32>
    %30 = vector.multi_reduction <maximumf>, %29, %cst_23 [0] : vector<8x8xf32> to vector<8xf32>
    %31 = vector.shape_cast %30 : vector<8xf32> to vector<1x8xf32>
    %32 = vector.broadcast %31 : vector<1x8xf32> to vector<8x8xf32>
    %33 = arith.subf %29, %32 : vector<8x8xf32>
    %34 = math.exp %33 : vector<8x8xf32>
    %cst_24 = arith.constant dense<0.000000e+00> : vector<8xf32>
    %35 = vector.multi_reduction <add>, %34, %cst_24 [0] : vector<8x8xf32> to vector<8xf32>
    %36 = vector.shape_cast %35 : vector<8xf32> to vector<1x8xf32>
    %37 = math.log %36 : vector<1x8xf32>
    %c0_25 = arith.constant 0 : index
    %c0_26 = arith.constant 0 : index
    %38 = vector.load %arg2[%c0_25, %c0_26] : memref<8x8xf32, #tpu.memory_space<vmem>>, vector<8x8xf32>
    %39 = arith.mulf %34, %38 : vector<8x8xf32>
    %cst_27 = arith.constant dense<0xFF800000> : vector<8xf32>
    %40 = vector.multi_reduction <maximumf>, %39, %cst_27 [0] : vector<8x8xf32> to vector<8xf32>
    %41 = vector.shape_cast %40 : vector<8xf32> to vector<1x8xf32>
    %42 = tpu.iota {dimensions = array<i32: 0>} : vector<8x8xi32>
    %43 = vector.broadcast %41 : vector<1x8xf32> to vector<8x8xf32>
    %44 = arith.cmpf oeq, %39, %43 : vector<8x8xf32>
    %c8_i32 = arith.constant 8 : i32
    %45 = vector.broadcast %c8_i32 : i32 to vector<8x8xi32>
    %46 = arith.select %44, %42, %45 : vector<8x8xi1>, vector<8x8xi32>
    %cst_28 = arith.constant dense<2147483647> : vector<8xi32>
    %47 = vector.multi_reduction <minsi>, %46, %cst_28 [0] : vector<8x8xi32> to vector<8xi32>
    %48 = vector.shape_cast %47 : vector<8xi32> to vector<1x8xi32>
    %49 = vector.broadcast %48 : vector<1x8xi32> to vector<8x8xi32>
    %50 = arith.cmpi eq, %42, %49 : vector<8x8xi32>
    %cst_29 = arith.constant 0.000000e+00 : f32
    %51 = vector.broadcast %cst_29 : f32 to vector<8x8xf32>
    %52 = arith.select %50, %29, %51 : vector<8x8xi1>, vector<8x8xf32>
    %cst_30 = arith.constant dense<0.000000e+00> : vector<8xf32>
    %53 = vector.multi_reduction <add>, %52, %cst_30 [0] : vector<8x8xf32> to vector<8xf32>
    %54 = vector.shape_cast %53 : vector<8xf32> to vector<1x8xf32>
    %c0_31 = arith.constant 0 : index
    %c0_32 = arith.constant 0 : index
    %55 = vector.load %arg11[%c0_31, %c0_32] : memref<1x8xi32, #tpu.memory_space<vmem>>, vector<1x8xi32>
    tpu.vector_store %arg11[%c0_31, %c0_32], %48 {strides = array<i32>} : memref<1x8xi32, #tpu.memory_space<vmem>>, vector<1x8xi32>,
    %56 = arith.subf %54, %31 : vector<1x8xf32>
    %57 = arith.subf %56, %37 : vector<1x8xf32>
    %c0_33 = arith.constant 0 : index
    %c0_34 = arith.constant 0 : index
    %58 = vector.load %arg12[%c0_33, %c0_34] : memref<1x8xf32, #tpu.memory_space<vmem>>, vector<1x8xf32>
    tpu.vector_store %arg12[%c0_33, %c0_34], %57 {strides = array<i32>} : memref<1x8xf32, #tpu.memory_space<vmem>>, vector<1x8xf32>,
    return
  }
  func.func @transform_0(%arg0: i32) -> (i32, i32) {
    %c0_i32 = arith.constant 0 : i32
    %c0_i32_0 = arith.constant 0 : i32
    return %arg0, %c0_i32 : i32, i32
  }
  func.func @transform_1(%arg0: i32) -> (i32, i32) {
    %c0_i32 = arith.constant 0 : i32
    %c0_i32_0 = arith.constant 0 : i32
    return %c0_i32, %arg0 : i32, i32
  }
  func.func @transform_2(%arg0: i32) -> (i32, i32) {
    %c0_i32 = arith.constant 0 : i32
    %c0_i32_0 = arith.constant 0 : i32
    %c0_i32_1 = arith.constant 0 : i32
    return %c0_i32, %c0_i32_0 : i32, i32
  }
  func.func @transform_3(%arg0: i32) -> (i32, i32) {
    %c0_i32 = arith.constant 0 : i32
    %c0_i32_0 = arith.constant 0 : i32
    %c0_i32_1 = arith.constant 0 : i32
    return %c0_i32, %c0_i32_0 : i32, i32
  }
  func.func @transform_4(%arg0: i32) -> (i32, i32) {
    %c0_i32 = arith.constant 0 : i32
    %c0_i32_0 = arith.constant 0 : i32
    %c0_i32_1 = arith.constant 0 : i32
    return %c0_i32, %c0_i32_0 : i32, i32
  }
  func.func @transform_5(%arg0: i32) -> (i32, i32) {
    %c0_i32 = arith.constant 0 : i32
    %c0_i32_0 = arith.constant 0 : i32
    %c0_i32_1 = arith.constant 0 : i32
    return %c0_i32, %c0_i32_0 : i32, i32
  }
  func.func @transform_6(%arg0: i32) -> (i32, i32) {
    %c0_i32 = arith.constant 0 : i32
    %c0_i32_0 = arith.constant 0 : i32
    %c0_i32_1 = arith.constant 0 : i32
    return %c0_i32, %c0_i32_0 : i32, i32
  }
  func.func @transform_7(%arg0: i32) -> (i32, i32) {
    %c0_i32 = arith.constant 0 : i32
    %c0_i32_0 = arith.constant 0 : i32
    %c0_i32_1 = arith.constant 0 : i32
    return %c0_i32, %c0_i32_0 : i32, i32
  }
  func.func @transform_8(%arg0: i32) -> (i32, i32) {
    %c0_i32 = arith.constant 0 : i32
    %c0_i32_0 = arith.constant 0 : i32
    %c0_i32_1 = arith.constant 0 : i32
    return %c0_i32, %c0_i32_0 : i32, i32
  }
  func.func @transform_9(%arg0: i32) -> (i32, i32) {
    %c0_i32 = arith.constant 0 : i32
    %c0_i32_0 = arith.constant 0 : i32
    %c0_i32_1 = arith.constant 0 : i32
    return %c0_i32, %c0_i32_0 : i32, i32
  }
  func.func @transform_10(%arg0: i32) -> (i32, i32) {
    %c0_i32 = arith.constant 0 : i32
    %c0_i32_0 = arith.constant 0 : i32
    return %c0_i32, %arg0 : i32, i32
  }
  func.func @transform_11(%arg0: i32) -> (i32, i32) {
    %c0_i32 = arith.constant 0 : i32
    %c0_i32_0 = arith.constant 0 : i32
    return %c0_i32, %arg0 : i32, i32
  }
}

</mosaic_0001>

<llo_original>
// kernel: tpu_custom_call.1
$region0: #{tpu_custom_call.1}
  #allocation0 [shape = 'u32[]', space=smem, size = 0x4, offset = 0x4, fixed_abs, tag = 'smem constant byte address 0x4 - core index']
  #allocation1 [shape = 'u32[144,128]{1,0:T(1,128)}', space=vmem, size = 0x12000, scoped, tag = 'internal scratch']
  %s0 = inlined_call_operand.vmem [shape: bf16[8,32], index: 0, kind: input, shape index: {}]
  %s1 = inlined_call_operand.vmem [shape: f32[8,8], index: 1, kind: input, shape index: {}]
  %s2 = inlined_call_operand.vmem [shape: bf16[32,64], index: 2, kind: input, shape index: {}]
  %s3 = inlined_call_operand.vmem [shape: f32[1,64], index: 3, kind: input, shape index: {}]
  %s4 = inlined_call_operand.vmem [shape: bf16[64,128], index: 4, kind: input, shape index: {}]
  %s5 = inlined_call_operand.vmem [shape: f32[1,128], index: 5, kind: input, shape index: {}]
  %s6 = inlined_call_operand.vmem [shape: bf16[128,64], index: 6, kind: input, shape index: {}]
  %s7 = inlined_call_operand.vmem [shape: f32[1,64], index: 7, kind: input, shape index: {}]
  %s8 = inlined_call_operand.vmem [shape: bf16[8,64], index: 8, kind: input, shape index: {}]
  %s9 = inlined_call_operand.vmem [shape: f32[8,1], index: 9, kind: input, shape index: {}]
  %s10 = inlined_call_operand.hbm [shape: s32[1,8], index: 10, kind: output, shape index: {0}]
  %s11 = inlined_call_operand.hbm [shape: f32[1,8], index: 11, kind: output, shape index: {1}]
  %12 = xla_tuple %s10, %s11
  %s13 = sld [smem:[#allocation0]]
  $region58: #{tpu_custom_call.1} parent=0
    _
  %s15 = ssub.s32 1, %s13
  %s16 = scalar_select 0, %s15, %s13
  $region1: #{tpu_custom_call.1} parent=0
    #allocation2 [shape = 'u8[512]{0}', space=vmem, size = 0x400, scoped, tag = 'output window, operand 0, single buffered']
    #allocation3 [shape = 's32[1]{0}', space=sflag, size = 0x4, scoped, tag = 'scoped memory for tpu_custom_call.1']
    #allocation4 [shape = 'u8[512]{0}', space=vmem, size = 0x400, scoped, tag = 'output window, operand 1, single buffered']
    #allocation5 [shape = 's32[1]{0}', space=sflag, size = 0x4, scoped, tag = 'scoped memory for tpu_custom_call.1']
    %17 = vsyncpa [#allocation3], 0
    %18 = vsyncpa [#allocation5], 0
    // Predicated region
    $region2: #{tpu_custom_call.1} parent=1 // pred_check
      _
    $region3: #{tpu_custom_call.1} parent=1 // pred_check_branch
      %20 = sbr.rel (0) target = $region5
    $region4: #{tpu_custom_call.1} parent=1 // pred_region
      _
    $region5: #{tpu_custom_call.1} parent=1 // pred_fallthru
      _
    // Predicated region
    $region6: #{tpu_custom_call.1} parent=1 // pred_check
      _
    $region7: #{tpu_custom_call.1} parent=1 // pred_check_branch
      %22 = sbr.rel (0) target = $region9
    $region8: #{tpu_custom_call.1} parent=1 // pred_region
      _
    $region9: #{tpu_custom_call.1} parent=1 // pred_fallthru
      _
    // Predicated region
    $region10: #{tpu_custom_call.1} parent=1 // pred_check
      _
    $region11: #{tpu_custom_call.1} parent=1 // pred_check_branch
      %24 = sbr.rel (0) target = $region13
    $region12: #{tpu_custom_call.1} parent=1 // pred_region
      _
    $region13: #{tpu_custom_call.1} parent=1 // pred_fallthru
      _
    // Predicated region
    $region14: #{tpu_custom_call.1} parent=1 // pred_check
      _
    $region15: #{tpu_custom_call.1} parent=1 // pred_check_branch
      %26 = sbr.rel (0) target = $region17
    $region16: #{tpu_custom_call.1} parent=1 // pred_region
      _
    $region17: #{tpu_custom_call.1} parent=1 // pred_fallthru
      _
    // Predicated region
    $region18: #{tpu_custom_call.1} parent=1 // pred_check
      _
    $region19: #{tpu_custom_call.1} parent=1 // pred_check_branch
      %28 = sbr.rel (0) target = $region21
    $region20: #{tpu_custom_call.1} parent=1 // pred_region
      _
    $region21: #{tpu_custom_call.1} parent=1 // pred_fallthru
      _
    // Predicated region
    $region22: #{tpu_custom_call.1} parent=1 // pred_check
      _
    $region23: #{tpu_custom_call.1} parent=1 // pred_check_branch
      %30 = sbr.rel (0) target = $region25
    $region24: #{tpu_custom_call.1} parent=1 // pred_region
      _
    $region25: #{tpu_custom_call.1} parent=1 // pred_fallthru
      _
    // Predicated region
    $region26: #{tpu_custom_call.1} parent=1 // pred_check
      _
    $region27: #{tpu_custom_call.1} parent=1 // pred_check_branch
      %32 = sbr.rel (0) target = $region29
    $region28: #{tpu_custom_call.1} parent=1 // pred_region
      _
    $region29: #{tpu_custom_call.1} parent=1 // pred_fallthru
      _
    // Predicated region
    $region30: #{tpu_custom_call.1} parent=1 // pred_check
      _
    $region31: #{tpu_custom_call.1} parent=1 // pred_check_branch
      %34 = sbr.rel (0) target = $region33
    $region32: #{tpu_custom_call.1} parent=1 // pred_region
      _
    $region33: #{tpu_custom_call.1} parent=1 // pred_fallthru
      _
    // Predicated region
    $region34: #{tpu_custom_call.1} parent=1 // pred_check
      _
    $region35: #{tpu_custom_call.1} parent=1 // pred_check_branch
      %36 = sbr.rel (0) target = $region37
    $region36: #{tpu_custom_call.1} parent=1 // pred_region
      _
    $region37: #{tpu_custom_call.1} parent=1 // pred_fallthru
      _
    // Predicated region
    $region38: #{tpu_custom_call.1} parent=1 // pred_check
      _
    $region39: #{tpu_custom_call.1} parent=1 // pred_check_branch
      %38 = sbr.rel (0) target = $region41
    $region40: #{tpu_custom_call.1} parent=1 // pred_region
      _
    $region41: #{tpu_custom_call.1} parent=1 // pred_fallthru
      _
    %v40 = vld [vmem:[%s0] sm:$0xf]
    %v41 = vld [vmem:[%s2] sm:$0xf]
    %v42 = vld [vmem:[%s2 + $0x4] sm:$0xf]
    %v43 = vld [vmem:[%s2 + $0x8] sm:$0xf]
    %v44 = vld [vmem:[%s2 + $0xc] sm:$0xf]
    %v45 = vld [vmem:[%s3] sm:$0x1]
    %v47 = vlaneseq
    %v48 = vshrl.u32 %v47, 7
    %v49 = vsub.s32 0, %v48
    %v50 = vrot.slane %v45, %v49
    %v56 = vunpack.c.l.b16 %v41
    %v57 = vunpack.c.l.b16 %v42
    %v58 = vunpack.c.l.b16 %v43
    %v59 = vunpack.c.l.b16 %v44
    %v60 = vpack.c.b16 %v57, %v56
    %v61 = vpack.c.b16 %v59, %v58
    %vm64 = vcmask 261120
    %v66 = vsel %vm64, %v40, 0
    %68 = vmatprep.subr.bf16.mxu0 0
    %69 = vmatpush1.bf16.msra.mxu0 0
    %70 = vmatprep.subr.bf16.mxu0 0
    %71 = vmatpush1.bf16.msra.mxu0 0
    %72 = vmatprep.subr.bf16.mxu0 0
    %73 = vmatpush1.bf16.msra.mxu0 0
    %74 = vmatprep.subr.bf16.mxu0 0
    %75 = vmatpush1.bf16.msra.mxu0 0
    %76 = vmatprep.subr.bf16.mxu0 0
    %77 = vmatpush1.bf16.msra.mxu0 0
    %78 = vmatprep.subr.bf16.mxu0 0
    %79 = vmatpush1.bf16.msra.mxu0 0
    %80 = vmatprep.subr.bf16.mxu0 0
    %81 = vmatpush1.bf16.msra.mxu0 %v61
    %82 = vmatprep.subr.bf16.mxu0 0
    %83 = vmatpush1.bf16.msra.mxu0 %v60
    %84 = vmatprep.subr.bf16.mxu0 0
    %85 = vmatpush2.bf16.msra.mxu0 0
    %86 = vmatprep.subr.bf16.mxu0 0
    %87 = vmatpush2.bf16.msra.mxu0 0
    %88 = vmatprep.subr.bf16.mxu0 0
    %89 = vmatpush2.bf16.msra.mxu0 0
    %90 = vmatprep.subr.bf16.mxu0 0
    %91 = vmatpush2.bf16.msra.mxu0 0
    %92 = vmatprep.subr.bf16.mxu0 0
    %93 = vmatpush2.bf16.msra.mxu0 0
    %94 = vmatprep.subr.bf16.mxu0 0
    %95 = vmatpush2.bf16.msra.mxu0 0
    %96 = vmatprep.subr.bf16.mxu0 0
    %97 = vmatpush2.bf16.msra.mxu0 0
    %98 = vmatprep.subr.bf16.mxu0 0
    %99 = vmatpush2.bf16.msra.mxu0 0
    %100 = vmatprep.mubr.bf16.mxu0 0
    %101 = vmatmul.mubr.bf16.gmra.mxu0 %v66
    %v102 = vpop.f32.mrf.mxu0
    %v103 = vadd.f32 %v50, %v102
    %v104 = vpop.f32.mrf.mxu0
    %v105 = vpop.f32.mrf.mxu0
    %v106 = vpop.f32.mrf.mxu0
    %107 = vdwg.mxu0
    %v108 = vmax.f32 %v103, 0.0
    %v109 = vpack.c.bf16 %v108, %v108
    %v110 = vld [vmem:[%s4] sm:$0xf]
    %v111 = vld [vmem:[%s4 + $0x4] sm:$0xf]
    %v112 = vld [vmem:[%s4 + $0x8] sm:$0xf]
    %v113 = vld [vmem:[%s4 + $0xc] sm:$0xf]
    %v114 = vld [vmem:[%s4 + $0x10] sm:$0xf]
    %v115 = vld [vmem:[%s4 + $0x14] sm:$0xf]
    %v116 = vld [vmem:[%s4 + $0x18] sm:$0xf]
    %v117 = vld [vmem:[%s4 + $0x1c] sm:$0xf]
    %v118 = vld [vmem:[%s5] sm:$0x1]
    %v120 = vlaneseq
    %v121 = vshrl.u32 %v120, 7
    %v122 = vsub.s32 0, %v121
    %v123 = vrot.slane %v118, %v122
    %v133 = vunpack.c.l.b16 %v110
    %v134 = vunpack.c.l.b16 %v111
    %v135 = vunpack.c.l.b16 %v112
    %v136 = vunpack.c.l.b16 %v113
    %v137 = vunpack.c.l.b16 %v114
    %v138 = vunpack.c.l.b16 %v115
    %v139 = vunpack.c.l.b16 %v116
    %v140 = vunpack.c.l.b16 %v117
    %v141 = vpack.c.b16 %v134, %v133
    %v142 = vpack.c.b16 %v136, %v135
    %v143 = vpack.c.b16 %v138, %v137
    %v144 = vpack.c.b16 %v140, %v139
    %vm149 = vcmask 523264
    %v151 = vsel %vm149, %v109, 0
    %153 = vmatprep.subr.bf16.mxu0 0
    %154 = vmatpush1.bf16.msra.mxu0 0
    %155 = vmatprep.subr.bf16.mxu0 0
    %156 = vmatpush1.bf16.msra.mxu0 0
    %157 = vmatprep.subr.bf16.mxu0 0
    %158 = vmatpush1.bf16.msra.mxu0 0
    %159 = vmatprep.subr.bf16.mxu0 0
    %160 = vmatpush1.bf16.msra.mxu0 0
    %161 = vmatprep.subr.bf16.mxu0 0
    %162 = vmatpush1.bf16.msra.mxu0 %v144
    %163 = vmatprep.subr.bf16.mxu0 0
    %164 = vmatpush1.bf16.msra.mxu0 %v143
    %165 = vmatprep.subr.bf16.mxu0 0
    %166 = vmatpush1.bf16.msra.mxu0 %v142
    %167 = vmatprep.subr.bf16.mxu0 0
    %168 = vmatpush1.bf16.msra.mxu0 %v141
    %169 = vmatprep.subr.bf16.mxu0 0
    %170 = vmatpush2.bf16.msra.mxu0 0
    %171 = vmatprep.subr.bf16.mxu0 0
    %172 = vmatpush2.bf16.msra.mxu0 0
    %173 = vmatprep.subr.bf16.mxu0 0
    %174 = vmatpush2.bf16.msra.mxu0 0
    %175 = vmatprep.subr.bf16.mxu0 0
    %176 = vmatpush2.bf16.msra.mxu0 0
    %177 = vmatprep.subr.bf16.mxu0 0
    %178 = vmatpush2.bf16.msra.mxu0 0
    %179 = vmatprep.subr.bf16.mxu0 0
    %180 = vmatpush2.bf16.msra.mxu0 0
    %181 = vmatprep.subr.bf16.mxu0 0
    %182 = vmatpush2.bf16.msra.mxu0 0
    %183 = vmatprep.subr.bf16.mxu0 0
    %184 = vmatpush2.bf16.msra.mxu0 0
    %185 = vmatprep.mubr.bf16.mxu0 0
    %186 = vmatmul.mubr.bf16.gmra.mxu0 %v151
    %v187 = vpop.f32.mrf.mxu0
    %v188 = vadd.f32 %v123, %v187
    %v189 = vpop.f32.mrf.mxu0
    %v190 = vpop.f32.mrf.mxu0
    %v191 = vpop.f32.mrf.mxu0
    %192 = vdwg.mxu0
    %v193 = vmax.f32 %v188, 0.0
    %v194 = vpack.c.bf16 %v193, %v193
    %v195 = vld [vmem:[%s6] sm:$0xf]
    %v196 = vld [vmem:[%s6 + $0x4] sm:$0xf]
    %v197 = vld [vmem:[%s6 + $0x8] sm:$0xf]
    %v198 = vld [vmem:[%s6 + $0xc] sm:$0xf]
    %v199 = vld [vmem:[%s6 + $0x10] sm:$0xf]
    %v200 = vld [vmem:[%s6 + $0x14] sm:$0xf]
    %v201 = vld [vmem:[%s6 + $0x18] sm:$0xf]
    %v202 = vld [vmem:[%s6 + $0x1c] sm:$0xf]
    %v203 = vld [vmem:[%s6 + $0x20] sm:$0xf]
    %v204 = vld [vmem:[%s6 + $0x24] sm:$0xf]
    %v205 = vld [vmem:[%s6 + $0x28] sm:$0xf]
    %v206 = vld [vmem:[%s6 + $0x2c] sm:$0xf]
    %v207 = vld [vmem:[%s6 + $0x30] sm:$0xf]
    %v208 = vld [vmem:[%s6 + $0x34] sm:$0xf]
    %v209 = vld [vmem:[%s6 + $0x38] sm:$0xf]
    %v210 = vld [vmem:[%s6 + $0x3c] sm:$0xf]
    %v211 = vld [vmem:[%s7] sm:$0x1]
    %v213 = vlaneseq
    %v214 = vshrl.u32 %v213, 7
    %v215 = vsub.s32 0, %v214
    %v216 = vrot.slane %v211, %v215
    %v234 = vunpack.c.l.b16 %v195
    %v235 = vunpack.c.l.b16 %v196
    %v236 = vunpack.c.l.b16 %v197
    %v237 = vunpack.c.l.b16 %v198
    %v238 = vunpack.c.l.b16 %v199
    %v239 = vunpack.c.l.b16 %v200
    %v240 = vunpack.c.l.b16 %v201
    %v241 = vunpack.c.l.b16 %v202
    %v242 = vunpack.c.l.b16 %v203
    %v243 = vunpack.c.l.b16 %v204
    %v244 = vunpack.c.l.b16 %v205
    %v245 = vunpack.c.l.b16 %v206
    %v246 = vunpack.c.l.b16 %v207
    %v247 = vunpack.c.l.b16 %v208
    %v248 = vunpack.c.l.b16 %v209
    %v249 = vunpack.c.l.b16 %v210
    %v250 = vpack.c.b16 %v235, %v234
    %v251 = vpack.c.b16 %v237, %v236
    %v252 = vpack.c.b16 %v239, %v238
    %v253 = vpack.c.b16 %v241, %v240
    %v254 = vpack.c.b16 %v243, %v242
    %v255 = vpack.c.b16 %v245, %v244
    %v256 = vpack.c.b16 %v247, %v246
    %v257 = vpack.c.b16 %v249, %v248
    %266 = vmatprep.subr.bf16.mxu0 0
    %267 = vmatpush1.bf16.msra.mxu0 %v257
    %268 = vmatprep.subr.bf16.mxu0 0
    %269 = vmatpush1.bf16.msra.mxu0 %v256
    %270 = vmatprep.subr.bf16.mxu0 0
    %271 = vmatpush1.bf16.msra.mxu0 %v255
    %272 = vmatprep.subr.bf16.mxu0 0
    %273 = vmatpush1.bf16.msra.mxu0 %v254
    %274 = vmatprep.subr.bf16.mxu0 0
    %275 = vmatpush1.bf16.msra.mxu0 %v253
    %276 = vmatprep.subr.bf16.mxu0 0
    %277 = vmatpush1.bf16.msra.mxu0 %v252
    %278 = vmatprep.subr.bf16.mxu0 0
    %279 = vmatpush1.bf16.msra.mxu0 %v251
    %280 = vmatprep.subr.bf16.mxu0 0
    %281 = vmatpush1.bf16.msra.mxu0 %v250
    %282 = vmatprep.subr.bf16.mxu0 0
    %283 = vmatpush2.bf16.msra.mxu0 0
    %284 = vmatprep.subr.bf16.mxu0 0
    %285 = vmatpush2.bf16.msra.mxu0 0
    %286 = vmatprep.subr.bf16.mxu0 0
    %287 = vmatpush2.bf16.msra.mxu0 0
    %288 = vmatprep.subr.bf16.mxu0 0
    %289 = vmatpush2.bf16.msra.mxu0 0
    %290 = vmatprep.subr.bf16.mxu0 0
    %291 = vmatpush2.bf16.msra.mxu0 0
    %292 = vmatprep.subr.bf16.mxu0 0
    %293 = vmatpush2.bf16.msra.mxu0 0
    %294 = vmatprep.subr.bf16.mxu0 0
    %295 = vmatpush2.bf16.msra.mxu0 0
    %296 = vmatprep.subr.bf16.mxu0 0
    %297 = vmatpush2.bf16.msra.mxu0 0
    %298 = vmatprep.mubr.bf16.mxu0 0
    %299 = vmatmul.mubr.bf16.gmra.mxu0 %v194
    %v300 = vpop.f32.mrf.mxu0
    %v301 = vadd.f32 %v216, %v300
    %v302 = vpop.f32.mrf.mxu0
    %v303 = vpop.f32.mrf.mxu0
    %v304 = vpop.f32.mrf.mxu0
    %305 = vdwg.mxu0
    %v306 = vmax.f32 %v301, 0.0
    %v307 = vpack.c.bf16 %v306, %v306
    %v308 = vld [vmem:[%s8] sm:$0xf]
    %v309 = vld [vmem:[%s9] sm:$0xff]
    %311 = vset.pattern.permute.xlu0 0
    %312 = vperm.xlu0 %311, %v309
    %v313 = vpop.permute.xlu0 %312
    %v316 = vsel %vm149, %v308, 0
    %v319 = vsel %vm149, %v307, 0
    %321 = vmatprep.subr.bf16.mxu0 0
    %322 = vmatpush1.bf16.xpose.msra.mxu0 0
    %323 = vmatprep.subr.bf16.mxu0 0
    %324 = vmatpush1.bf16.xpose.msra.mxu0 0
    %325 = vmatprep.subr.bf16.mxu0 0
    %326 = vmatpush1.bf16.xpose.msra.mxu0 0
    %327 = vmatprep.subr.bf16.mxu0 0
    %328 = vmatpush1.bf16.xpose.msra.mxu0 0
    %329 = vmatprep.subr.bf16.mxu0 0
    %330 = vmatpush1.bf16.xpose.msra.mxu0 0
    %331 = vmatprep.subr.bf16.mxu0 0
    %332 = vmatpush1.bf16.xpose.msra.mxu0 0
    %333 = vmatprep.subr.bf16.mxu0 0
    %334 = vmatpush1.bf16.xpose.msra.mxu0 0
    %335 = vmatprep.subr.bf16.mxu0 0
    %336 = vmatpush1.bf16.xpose.msra.mxu0 %v319
    %337 = vmatprep.subr.bf16.mxu0 0
    %338 = vmatpush2.bf16.xpose.msra.mxu0 0
    %339 = vmatprep.subr.bf16.mxu0 0
    %340 = vmatpush2.bf16.xpose.msra.mxu0 0
    %341 = vmatprep.subr.bf16.mxu0 0
    %342 = vmatpush2.bf16.xpose.msra.mxu0 0
    %343 = vmatprep.subr.bf16.mxu0 0
    %344 = vmatpush2.bf16.xpose.msra.mxu0 0
    %345 = vmatprep.subr.bf16.mxu0 0
    %346 = vmatpush2.bf16.xpose.msra.mxu0 0
    %347 = vmatprep.subr.bf16.mxu0 0
    %348 = vmatpush2.bf16.xpose.msra.mxu0 0
    %349 = vmatprep.subr.bf16.mxu0 0
    %350 = vmatpush2.bf16.xpose.msra.mxu0 0
    %351 = vmatprep.subr.bf16.mxu0 0
    %352 = vmatpush2.bf16.xpose.msra.mxu0 0
    %353 = vmatprep.mubr.bf16.mxu0 0
    %354 = vmatmul.mubr.bf16.gmra.mxu0 %v316
    %v355 = vpop.f32.mrf.mxu0
    %v356 = vadd.f32 %v313, %v355
    %v357 = vpop.f32.mrf.mxu0
    %v358 = vpop.f32.mrf.mxu0
    %v359 = vpop.f32.mrf.mxu0
    %360 = vdwg.mxu0
    %vm361 = vcmask 64512
    %v362 = vsel %vm361, %v356, -inf
    %v363 = vrot.slane %v362, 4
    %v364 = vmax.f32 %v362, %v363
    %v365 = vrot.slane %v364, 2
    %v366 = vmax.f32 %v364, %v365
    %v367 = vrot.slane %v366, 1
    %v368 = vmax.f32 %v366, %v367
    %v369 = vsub.f32 %v356, %v368
    %v370 = vmul.f32 %v369, 1.442695
    %v371 = vpow.pop %v370
    %v372 = vsel %vm361, %v371, 0.0
    %v373 = vrot.slane %v372, 4
    %v374 = vadd.f32 %v372, %v373
    %v375 = vrot.slane %v374, 2
    %v376 = vadd.f32 %v374, %v375
    %v377 = vrot.slane %v376, 1
    %v378 = vadd.f32 %v376, %v377
    %v379 = vlog2.pop %v378
    %v380 = vmul.f32 %v379, 0.6931472
    %v381 = vld [vmem:[%s1] sm:$0xff]
    %v382 = vmul.f32 %v371, %v381
    %v383 = vsel %vm361, %v382, -inf
    %v384 = vrot.slane %v383, 4
    %v385 = vmax.f32 %v383, %v384
    %v386 = vrot.slane %v385, 2
    %v387 = vmax.f32 %v385, %v386
    %v388 = vrot.slane %v387, 1
    %v389 = vmax.f32 %v387, %v388
    %v390 = vlaneseq
    %v391 = vshrl.u32 %v390, 7
    %vm392 = vcmp.eq.f32.partialorder %v382, %v389
    %v393 = vsel %vm392, %v391, 8
    %v394 = vsel %vm361, %v393, 2147483647
    %v395 = vrot.slane %v394, 4
    %vm396 = vcmp.lt.s32.totalorder %v394, %v395
    %v397 = vsel %vm396, %v394, %v395
    %v398 = vrot.slane %v397, 2
    %vm399 = vcmp.lt.s32.totalorder %v397, %v398
    %v400 = vsel %vm399, %v397, %v398
    %v401 = vrot.slane %v400, 1
    %vm402 = vcmp.lt.s32.totalorder %v400, %v401
    %v403 = vsel %vm402, %v400, %v401
    %vm404 = vcmp.eq.s32.totalorder %v391, %v403
    %v405 = vsel %vm404, %v356, 0.0
    %v406 = vsel %vm361, %v405, 0.0
    %v407 = vrot.slane %v406, 4
    %v408 = vadd.f32 %v406, %v407
    %v409 = vrot.slane %v408, 2
    %v410 = vadd.f32 %v408, %v409
    %v411 = vrot.slane %v410, 1
    %v412 = vadd.f32 %v410, %v411
    %vm413 = vcmask 57344
    %414 = vst.msk [vmem:[#allocation2] sm:$0x1] %vm413, %v403
    %v415 = vsub.f32 %v412, %v368
    %v416 = vsub.f32 %v415, %v380
    %417 = vst.msk [vmem:[#allocation4] sm:$0x1] %vm413, %v416
    // Predicated region
    $region42: #{tpu_custom_call.1} parent=1 // pred_check
      _
    $region43: #{tpu_custom_call.1} parent=1 // pred_check_branch
      %419 = sbr.rel (0) target = $region45
    $region44: #{tpu_custom_call.1} parent=1 // pred_region
      %s421 = ssub.s32 16, 16
      %422 = vsyncadd [#allocation3], %s421
      %s424 = sshll.u32 [#allocation2], 4
      %s425 = int_to_ptr.vmem [resolvable:$true] %s424
      %427 = dma.vmem_to_hbm [thread:$0]  %s425, 16, %s10, [#allocation3]
    $region45: #{tpu_custom_call.1} parent=1 // pred_fallthru
      _
    // Predicated region
    $region46: #{tpu_custom_call.1} parent=1 // pred_check
      _
    $region47: #{tpu_custom_call.1} parent=1 // pred_check_branch
      %429 = sbr.rel (0) target = $region49
    $region48: #{tpu_custom_call.1} parent=1 // pred_region
      %s431 = ssub.s32 16, 16
      %432 = vsyncadd [#allocation5], %s431
      %s434 = sshll.u32 [#allocation4], 4
      %s435 = int_to_ptr.vmem [resolvable:$true] %s434
      %437 = dma.vmem_to_hbm [thread:$0]  %s435, 16, %s11, [#allocation5]
    $region49: #{tpu_custom_call.1} parent=1 // pred_fallthru
      _
    // Predicated region
    $region50: #{tpu_custom_call.1} parent=1 // pred_check
      _
    $region51: #{tpu_custom_call.1} parent=1 // pred_check_branch
      %439 = sbr.rel (0) target = $region53
    $region52: #{tpu_custom_call.1} parent=1 // pred_region
      %440 = dma.done [#allocation3], 16
    $region53: #{tpu_custom_call.1} parent=1 // pred_fallthru
      _
    // Predicated region
    $region54: #{tpu_custom_call.1} parent=1 // pred_check
      _
    $region55: #{tpu_custom_call.1} parent=1 // pred_check_branch
      %442 = sbr.rel (0) target = $region57
    $region56: #{tpu_custom_call.1} parent=1 // pred_region
      %443 = dma.done [#allocation5], 16
    $region57: #{tpu_custom_call.1} parent=1 // pred_fallthru
      _
    %444 = vsyncpa [#allocation3], 1
    %445 = vsyncpa [#allocation5], 1

</llo_original>
